<compile_context>
chip_gen: v6e
topology: v6e:2x2x1
jax: 0.10.0
libtpu: 0.0.40
codegen_flags: <defaults>
</compile_context>

<pallas_src>
import jax
import jax.numpy as jnp
from jax.experimental import pallas as pl
from jax.experimental.pallas import tpu as pltpu

EPS = 1e-5  # PyTorch InstanceNorm2d default eps (affine=False, no running stats)


def _make_kernel(H, W, C, B_blk):
    HW = H * W
    BHW = B_blk * HW
    inv_hw = 1.0 / HW

    def kernel(x_ref, w1_ref, w2_ref, o_ref):
        x = x_ref[0]                                        # (C, BHW) f32

        # ---- hoisted per-image boundary masks (computed once, reused by both convs)
        pos = jax.lax.broadcasted_iota(jnp.int32, (1, BHW), 1)
        if HW & (HW - 1) == 0:                              # per-image flat index
            q = jnp.bitwise_and(pos, HW - 1)
        else:
            q = pos % HW
        if W & (W - 1) == 0:                                # power-of-two fast path
            w_idx = jnp.bitwise_and(q, W - 1)
            h_idx = jnp.right_shift(q, W.bit_length() - 1)
        else:
            h_idx = q // W
            w_idx = q - h_idx * W

        row_ok = {-1: h_idx >= 1, 0: None, 1: h_idx < H - 1}
        col_ok = {-1: w_idx >= 1, 0: None, 1: w_idx < W - 1}
        taps = []                                           # [(lane shift, mask|None)]
        for dh in (-1, 0, 1):
            for dw in (-1, 0, 1):
                m = row_ok[dh]
                if col_ok[dw] is not None:
                    m = col_ok[dw] if m is None else (m & col_ok[dw])
                taps.append((dh * W + dw, m))

        def build_patch(img):
            # im2col fully in vregs: 9 shifted+masked taps -> (9*C, BHW).
            parts = []
            for s, m in taps:
                sh = img if s == 0 else pltpu.roll(img, shift=(-s) % BHW, axis=1)
                if m is not None:
                    sh = jnp.where(m, sh, 0.0)              # (1,BHW) mask broadcasts over C
                parts.append(sh)
            return jnp.concatenate(parts, axis=0)

        def conv(w_ref, img):
            # one MXU matmul per conv: (C, 9C) @ (9C, BHW) -> (C, BHW); no bias
            # (affine=False InstanceNorm right after makes it mathematically dead).
            return jnp.dot(w_ref[...], build_patch(img),
                           preferred_element_type=jnp.float32)

        def inorm(y):
            # single-pass mean/var per (image, channel); reductions are per-image.
            if B_blk == 1:
                s1 = jnp.sum(y, axis=1, keepdims=True)
                s2 = jnp.sum(y * y, axis=1, keepdims=True)
                mean = s1 * inv_hw
                var = s2 * inv_hw - mean * mean
                return (y - mean) * jax.lax.rsqrt(var + EPS)
            y3 = y.reshape(C, B_blk, HW)
            s1 = jnp.sum(y3, axis=2, keepdims=True)
            s2 = jnp.sum(y3 * y3, axis=2, keepdims=True)
            mean = s1 * inv_hw
            var = s2 * inv_hw - mean * mean
            return ((y3 - mean) * jax.lax.rsqrt(var + EPS)).reshape(C, BHW)

        h1 = jnp.maximum(inorm(conv(w1_ref, x)), 0.0)       # ReLU
        h2 = inorm(conv(w2_ref, h1))
        o_ref[0] = x + h2                                   # residual add, lane-dense out

    return kernel


def residual_block(x_nchw, w1, b1, w2, b2):
    """x_nchw: (N, C, H, W) f32; w*: (3,3,Cin,Cout) HWIO; b*: (C,) (accepted but
    unused in the kernel: both convs feed affine=False InstanceNorm2d, which
    subtracts the per-channel mean, so the biases cancel exactly)."""
    del b1, b2
    x = x_nchw.astype(jnp.float32)
    N, C, H, W = x.shape
    HW = H * W

    # Batch folding: B_blk images per grid step on the lane (matmul-N) axis.
    # Keep >= 2 grid steps when the batch allows it so ("parallel",) can shard
    # across both v7x TensorCores; otherwise fold everything into one step.
    num_steps = 2 if (N >= 2 and N % 2 == 0) else 1
    B_blk = N // num_steps
    BHW = B_blk * HW

    # (N,C,H,W) -> (num_steps, C, B_blk*HW): lane-concatenate the B_blk images
    # of each step per channel.  For B_blk == 1 this is a pure reshape.
    x_fold = x.reshape(num_steps, B_blk, C, HW)
    x_fold = jnp.transpose(x_fold, (0, 2, 1, 3)).reshape(num_steps, C, BHW)

    def to_mat(w):
        # HWIO (3,3,Cin,Cout) -> (Cout, 9*Cin); tap-major (kh, kw), ci minor,
        # matching the patch row order in build_patch.
        return jnp.transpose(w.astype(jnp.float32), (3, 0, 1, 2)).reshape(C, 9 * C)

    w1m, w2m = to_mat(w1), to_mat(w2)

    # VMEM scaling note (enforce before growing shapes): the in-register patch
    # is ~9*C*BHW*4 B plus double-buffered (C,BHW) in/out tiles.  E.g. C=256 at
    # 64x64 spatial is ~38 MiB f32 -- over v7x's 32 MiB scoped default and more
    # than half its 64 MiB physical VMEM (fine on v5e/v6e's 128 MiB).  At that
    # scale: add an H-row-tile grid axis with a 1-row halo (or accumulate over
    # tap chunks of K), cast patch + weights to bf16 (keep f32 accumulation and
    # f32 InstanceNorm/masks -- v5e has no bf16 VPU/EUP), and raise
    # vmem_limit_bytes via CompilerParams.  At these shapes everything fits
    # trivially, and the tiny constant-index weight tiles (~576 B) stay
    # resident regardless, so single-buffering them is not worth the churn.
    out = pl.pallas_call(
        _make_kernel(H, W, C, B_blk),
        out_shape=jax.ShapeDtypeStruct((num_steps, C, BHW), jnp.float32),
        grid_spec=pltpu.PrefetchScalarGridSpec(
            num_scalar_prefetch=0,
            grid=(num_steps,),
            in_specs=[
                pl.BlockSpec((1, C, BHW), lambda s: (s, 0, 0)),
                pl.BlockSpec((C, 9 * C), lambda s: (0, 0)),
                pl.BlockSpec((C, 9 * C), lambda s: (0, 0)),
            ],
            out_specs=pl.BlockSpec((1, C, BHW), lambda s: (s, 0, 0)),
        ),
        compiler_params=pltpu.CompilerParams(
            dimension_semantics=("parallel",)),   # independent steps -> both v7x TCs
    )(x_fold, w1m, w2m)

    # inverse fold back to NCHW
    out = out.reshape(num_steps, C, B_blk, HW)
    out = jnp.transpose(out, (0, 2, 1, 3)).reshape(N, C, H, W)
    return out


def _reference(x_nchw, w1, b1, w2, b2):
    """Plain-JAX reference matching the PyTorch module (biases applied here)."""
    def conv(x, w, b):
        y = jax.lax.conv_general_dilated(
            x, w, window_strides=(1, 1), padding="SAME",
            dimension_numbers=("NCHW", "HWIO", "NCHW"))
        return y + b[None, :, None, None]

    def inorm(x):
        m = jnp.mean(x, axis=(2, 3), keepdims=True)
        v = jnp.mean((x - m) ** 2, axis=(2, 3), keepdims=True)
        return (x - m) * jax.lax.rsqrt(v + EPS)

    h = jax.nn.relu(inorm(conv(x_nchw, w1, b1)))
    h = inorm(conv(h, w2, b2))
    return x_nchw + h


if __name__ == "__main__":
    key = jax.random.PRNGKey(0)
    kx, kw1, kb1, kw2, kb2 = jax.random.split(key, 5)

    N, C, H, W = 2, 4, 16, 16
    x = jax.random.normal(kx, (N, C, H, W), jnp.float32)

    # Deterministic Conv2d(dim, dim, 3) params (PyTorch-style uniform bounds).
    fan_in = C * 3 * 3
    bound = 1.0 / (fan_in ** 0.5)
    w1 = jax.random.uniform(kw1, (3, 3, C, C), jnp.float32, -bound, bound)
    b1 = jax.random.uniform(kb1, (C,), jnp.float32, -bound, bound)
    w2 = jax.random.uniform(kw2, (3, 3, C, C), jnp.float32, -bound, bound)
    b2 = jax.random.uniform(kb2, (C,), jnp.float32, -bound, bound)

    out = jax.block_until_ready(residual_block(x, w1, b1, w2, b2))
    ref = _reference(x, w1, b1, w2, b2)

    assert out.shape == (N, C, H, W)
    assert jnp.allclose(out, ref, atol=1e-4, rtol=1e-4), \
        float(jnp.max(jnp.abs(out - ref)))
    print("KERNEL_OK")
</pallas_src>

<mosaic_0001>
module attributes {stable_mosaic.version = 11 : i64} {
  func.func @kernel(%arg0: i32, %arg1: memref<1x4x256xf32, #tpu.memory_space<vmem>>, %arg2: memref<4x36xf32, #tpu.memory_space<vmem>>, %arg3: memref<4x36xf32, #tpu.memory_space<vmem>>, %arg4: memref<1x4x256xf32, #tpu.memory_space<vmem>>) attributes {dimension_semantics = [#tpu.dimension_semantics<parallel>], iteration_bounds = array<i64: 2>, scalar_prefetch = 0 : i64, scratch_operands = 0 : i64, tpu.core_type = #tpu.core_type<tc>, window_params = [{transform_indices = @transform_0, window_bounds = array<i64: 1, 4, 256>}, {pipeline_mode = #tpu.pipeline_mode<synchronous>, transform_indices = @transform_1, window_bounds = array<i64: 4, 36>}, {pipeline_mode = #tpu.pipeline_mode<synchronous>, transform_indices = @transform_2, window_bounds = array<i64: 4, 36>}, {transform_indices = @transform_3, window_bounds = array<i64: 1, 4, 256>}]} {
    %c0 = arith.constant 0 : index
    %c0_0 = arith.constant 0 : index
    %c0_1 = arith.constant 0 : index
    %0 = vector.load %arg1[%c0, %c0_0, %c0_1] : memref<1x4x256xf32, #tpu.memory_space<vmem>>, vector<1x4x256xf32>
    %1 = vector.shape_cast %0 : vector<1x4x256xf32> to vector<4x256xf32>
    %2 = tpu.iota {dimensions = array<i32: 1>} : vector<1x256xi32>
    %c255_i32 = arith.constant 255 : i32
    %3 = vector.broadcast %c255_i32 : i32 to vector<1x256xi32>
    %4 = arith.andi %2, %3 : vector<1x256xi32>
    %c15_i32 = arith.constant 15 : i32
    %5 = vector.broadcast %c15_i32 : i32 to vector<1x256xi32>
    %6 = arith.andi %4, %5 : vector<1x256xi32>
    %c4_i32 = arith.constant 4 : i32
    %7 = vector.broadcast %c4_i32 : i32 to vector<1x256xi32>
    %8 = arith.shrsi %4, %7 : vector<1x256xi32>
    %c1_i32 = arith.constant 1 : i32
    %9 = vector.broadcast %c1_i32 : i32 to vector<1x256xi32>
    %10 = arith.cmpi sge, %8, %9 : vector<1x256xi32>
    %c15_i32_2 = arith.constant 15 : i32
    %11 = vector.broadcast %c15_i32_2 : i32 to vector<1x256xi32>
    %12 = arith.cmpi slt, %8, %11 : vector<1x256xi32>
    %c1_i32_3 = arith.constant 1 : i32
    %13 = vector.broadcast %c1_i32_3 : i32 to vector<1x256xi32>
    %14 = arith.cmpi sge, %6, %13 : vector<1x256xi32>
    %c15_i32_4 = arith.constant 15 : i32
    %15 = vector.broadcast %c15_i32_4 : i32 to vector<1x256xi32>
    %16 = arith.cmpi slt, %6, %15 : vector<1x256xi32>
    %17 = arith.andi %10, %14 : vector<1x256xi1>
    %18 = arith.andi %10, %16 : vector<1x256xi1>
    %19 = arith.andi %12, %14 : vector<1x256xi1>
    %20 = arith.andi %12, %16 : vector<1x256xi1>
    %c0_5 = arith.constant 0 : index
    %c0_6 = arith.constant 0 : index
    %21 = vector.load %arg2[%c0_5, %c0_6] : memref<4x36xf32, #tpu.memory_space<vmem>>, vector<4x36xf32>
    %c17_i32 = arith.constant 17 : i32
    %22 = tpu.dynamic_rotate %1 by %c17_i32 dim 1 : vector<4x256xf32>, i32 -> vector<4x256xf32>
    %cst = arith.constant 0.000000e+00 : f32
    %23 = vector.shape_cast %17 : vector<1x256xi1> to vector<1x256xi1>
    %24 = vector.broadcast %23 : vector<1x256xi1> to vector<4x256xi1>
    %25 = vector.broadcast %cst : f32 to vector<4x256xf32>
    %26 = arith.select %24, %22, %25 : vector<4x256xi1>, vector<4x256xf32>
    %c16_i32 = arith.constant 16 : i32
    %27 = tpu.dynamic_rotate %1 by %c16_i32 dim 1 : vector<4x256xf32>, i32 -> vector<4x256xf32>
    %cst_7 = arith.constant 0.000000e+00 : f32
    %28 = vector.shape_cast %10 : vector<1x256xi1> to vector<1x256xi1>
    %29 = vector.broadcast %28 : vector<1x256xi1> to vector<4x256xi1>
    %30 = vector.broadcast %cst_7 : f32 to vector<4x256xf32>
    %31 = arith.select %29, %27, %30 : vector<4x256xi1>, vector<4x256xf32>
    %c15_i32_8 = arith.constant 15 : i32
    %32 = tpu.dynamic_rotate %1 by %c15_i32_8 dim 1 : vector<4x256xf32>, i32 -> vector<4x256xf32>
    %cst_9 = arith.constant 0.000000e+00 : f32
    %33 = vector.shape_cast %18 : vector<1x256xi1> to vector<1x256xi1>
    %34 = vector.broadcast %33 : vector<1x256xi1> to vector<4x256xi1>
    %35 = vector.broadcast %cst_9 : f32 to vector<4x256xf32>
    %36 = arith.select %34, %32, %35 : vector<4x256xi1>, vector<4x256xf32>
    %c1_i32_10 = arith.constant 1 : i32
    %37 = tpu.dynamic_rotate %1 by %c1_i32_10 dim 1 : vector<4x256xf32>, i32 -> vector<4x256xf32>
    %cst_11 = arith.constant 0.000000e+00 : f32
    %38 = vector.shape_cast %14 : vector<1x256xi1> to vector<1x256xi1>
    %39 = vector.broadcast %38 : vector<1x256xi1> to vector<4x256xi1>
    %40 = vector.broadcast %cst_11 : f32 to vector<4x256xf32>
    %41 = arith.select %39, %37, %40 : vector<4x256xi1>, vector<4x256xf32>
    %c255_i32_12 = arith.constant 255 : i32
    %42 = tpu.dynamic_rotate %1 by %c255_i32_12 dim 1 : vector<4x256xf32>, i32 -> vector<4x256xf32>
    %cst_13 = arith.constant 0.000000e+00 : f32
    %43 = vector.shape_cast %16 : vector<1x256xi1> to vector<1x256xi1>
    %44 = vector.broadcast %43 : vector<1x256xi1> to vector<4x256xi1>
    %45 = vector.broadcast %cst_13 : f32 to vector<4x256xf32>
    %46 = arith.select %44, %42, %45 : vector<4x256xi1>, vector<4x256xf32>
    %c241_i32 = arith.constant 241 : i32
    %47 = tpu.dynamic_rotate %1 by %c241_i32 dim 1 : vector<4x256xf32>, i32 -> vector<4x256xf32>
    %cst_14 = arith.constant 0.000000e+00 : f32
    %48 = vector.shape_cast %19 : vector<1x256xi1> to vector<1x256xi1>
    %49 = vector.broadcast %48 : vector<1x256xi1> to vector<4x256xi1>
    %50 = vector.broadcast %cst_14 : f32 to vector<4x256xf32>
    %51 = arith.select %49, %47, %50 : vector<4x256xi1>, vector<4x256xf32>
    %c240_i32 = arith.constant 240 : i32
    %52 = tpu.dynamic_rotate %1 by %c240_i32 dim 1 : vector<4x256xf32>, i32 -> vector<4x256xf32>
    %cst_15 = arith.constant 0.000000e+00 : f32
    %53 = vector.shape_cast %12 : vector<1x256xi1> to vector<1x256xi1>
    %54 = vector.broadcast %53 : vector<1x256xi1> to vector<4x256xi1>
    %55 = vector.broadcast %cst_15 : f32 to vector<4x256xf32>
    %56 = arith.select %54, %52, %55 : vector<4x256xi1>, vector<4x256xf32>
    %c239_i32 = arith.constant 239 : i32
    %57 = tpu.dynamic_rotate %1 by %c239_i32 dim 1 : vector<4x256xf32>, i32 -> vector<4x256xf32>
    %cst_16 = arith.constant 0.000000e+00 : f32
    %58 = vector.shape_cast %20 : vector<1x256xi1> to vector<1x256xi1>
    %59 = vector.broadcast %58 : vector<1x256xi1> to vector<4x256xi1>
    %60 = vector.broadcast %cst_16 : f32 to vector<4x256xf32>
    %61 = arith.select %59, %57, %60 : vector<4x256xi1>, vector<4x256xf32>
    %62 = tpu.concatenate %26, %31, %36, %41, %1, %46, %51, %56, %61 in 0 : vector<4x256xf32>, vector<4x256xf32>, vector<4x256xf32>, vector<4x256xf32>, vector<4x256xf32>, vector<4x256xf32>, vector<4x256xf32>, vector<4x256xf32>, vector<4x256xf32> -> vector<36x256xf32>
    %cst_17 = arith.constant dense<0.000000e+00> : vector<4x256xf32>
    %63 = tpu.matmul %21, %62, %cst_17 {dimension_numbers = #tpu.dot_dimension_numbers<[1], [0], [0], [1], [0, 0, 1, 1], [], []>} : vector<4x36xf32>, vector<36x256xf32>, vector<4x256xf32> -> vector<4x256xf32>
    %cst_18 = arith.constant dense<0.000000e+00> : vector<4xf32>
    %64 = vector.multi_reduction <add>, %63, %cst_18 [1] : vector<4x256xf32> to vector<4xf32>
    %65 = vector.shape_cast %64 : vector<4xf32> to vector<4x1xf32>
    %66 = arith.mulf %63, %63 : vector<4x256xf32>
    %cst_19 = arith.constant dense<0.000000e+00> : vector<4xf32>
    %67 = vector.multi_reduction <add>, %66, %cst_19 [1] : vector<4x256xf32> to vector<4xf32>
    %68 = vector.shape_cast %67 : vector<4xf32> to vector<4x1xf32>
    %cst_20 = arith.constant 3.906250e-03 : f32
    %69 = vector.broadcast %cst_20 : f32 to vector<4x1xf32>
    %70 = arith.mulf %65, %69 : vector<4x1xf32>
    %cst_21 = arith.constant 3.906250e-03 : f32
    %71 = vector.broadcast %cst_21 : f32 to vector<4x1xf32>
    %72 = arith.mulf %68, %71 : vector<4x1xf32>
    %73 = arith.mulf %70, %70 : vector<4x1xf32>
    %74 = arith.subf %72, %73 : vector<4x1xf32>
    %75 = vector.broadcast %70 : vector<4x1xf32> to vector<4x256xf32>
    %76 = arith.subf %63, %75 : vector<4x256xf32>
    %cst_22 = arith.constant 9.99999974E-6 : f32
    %77 = vector.broadcast %cst_22 : f32 to vector<4x1xf32>
    %78 = arith.addf %74, %77 : vector<4x1xf32>
    %79 = math.rsqrt %78 : vector<4x1xf32>
    %80 = vector.broadcast %79 : vector<4x1xf32> to vector<4x256xf32>
    %81 = arith.mulf %76, %80 : vector<4x256xf32>
    %cst_23 = arith.constant 0.000000e+00 : f32
    %82 = vector.broadcast %cst_23 : f32 to vector<4x256xf32>
    %83 = arith.maximumf %81, %82 : vector<4x256xf32>
    %c0_24 = arith.constant 0 : index
    %c0_25 = arith.constant 0 : index
    %84 = vector.load %arg3[%c0_24, %c0_25] : memref<4x36xf32, #tpu.memory_space<vmem>>, vector<4x36xf32>
    %c17_i32_26 = arith.constant 17 : i32
    %85 = tpu.dynamic_rotate %83 by %c17_i32_26 dim 1 : vector<4x256xf32>, i32 -> vector<4x256xf32>
    %cst_27 = arith.constant 0.000000e+00 : f32
    %86 = vector.shape_cast %17 : vector<1x256xi1> to vector<1x256xi1>
    %87 = vector.broadcast %86 : vector<1x256xi1> to vector<4x256xi1>
    %88 = vector.broadcast %cst_27 : f32 to vector<4x256xf32>
    %89 = arith.select %87, %85, %88 : vector<4x256xi1>, vector<4x256xf32>
    %c16_i32_28 = arith.constant 16 : i32
    %90 = tpu.dynamic_rotate %83 by %c16_i32_28 dim 1 : vector<4x256xf32>, i32 -> vector<4x256xf32>
    %cst_29 = arith.constant 0.000000e+00 : f32
    %91 = vector.shape_cast %10 : vector<1x256xi1> to vector<1x256xi1>
    %92 = vector.broadcast %91 : vector<1x256xi1> to vector<4x256xi1>
    %93 = vector.broadcast %cst_29 : f32 to vector<4x256xf32>
    %94 = arith.select %92, %90, %93 : vector<4x256xi1>, vector<4x256xf32>
    %c15_i32_30 = arith.constant 15 : i32
    %95 = tpu.dynamic_rotate %83 by %c15_i32_30 dim 1 : vector<4x256xf32>, i32 -> vector<4x256xf32>
    %cst_31 = arith.constant 0.000000e+00 : f32
    %96 = vector.shape_cast %18 : vector<1x256xi1> to vector<1x256xi1>
    %97 = vector.broadcast %96 : vector<1x256xi1> to vector<4x256xi1>
    %98 = vector.broadcast %cst_31 : f32 to vector<4x256xf32>
    %99 = arith.select %97, %95, %98 : vector<4x256xi1>, vector<4x256xf32>
    %c1_i32_32 = arith.constant 1 : i32
    %100 = tpu.dynamic_rotate %83 by %c1_i32_32 dim 1 : vector<4x256xf32>, i32 -> vector<4x256xf32>
    %cst_33 = arith.constant 0.000000e+00 : f32
    %101 = vector.shape_cast %14 : vector<1x256xi1> to vector<1x256xi1>
    %102 = vector.broadcast %101 : vector<1x256xi1> to vector<4x256xi1>
    %103 = vector.broadcast %cst_33 : f32 to vector<4x256xf32>
    %104 = arith.select %102, %100, %103 : vector<4x256xi1>, vector<4x256xf32>
    %c255_i32_34 = arith.constant 255 : i32
    %105 = tpu.dynamic_rotate %83 by %c255_i32_34 dim 1 : vector<4x256xf32>, i32 -> vector<4x256xf32>
    %cst_35 = arith.constant 0.000000e+00 : f32
    %106 = vector.shape_cast %16 : vector<1x256xi1> to vector<1x256xi1>
    %107 = vector.broadcast %106 : vector<1x256xi1> to vector<4x256xi1>
    %108 = vector.broadcast %cst_35 : f32 to vector<4x256xf32>
    %109 = arith.select %107, %105, %108 : vector<4x256xi1>, vector<4x256xf32>
    %c241_i32_36 = arith.constant 241 : i32
    %110 = tpu.dynamic_rotate %83 by %c241_i32_36 dim 1 : vector<4x256xf32>, i32 -> vector<4x256xf32>
    %cst_37 = arith.constant 0.000000e+00 : f32
    %111 = vector.shape_cast %19 : vector<1x256xi1> to vector<1x256xi1>
    %112 = vector.broadcast %111 : vector<1x256xi1> to vector<4x256xi1>
    %113 = vector.broadcast %cst_37 : f32 to vector<4x256xf32>
    %114 = arith.select %112, %110, %113 : vector<4x256xi1>, vector<4x256xf32>
    %c240_i32_38 = arith.constant 240 : i32
    %115 = tpu.dynamic_rotate %83 by %c240_i32_38 dim 1 : vector<4x256xf32>, i32 -> vector<4x256xf32>
    %cst_39 = arith.constant 0.000000e+00 : f32
    %116 = vector.shape_cast %12 : vector<1x256xi1> to vector<1x256xi1>
    %117 = vector.broadcast %116 : vector<1x256xi1> to vector<4x256xi1>
    %118 = vector.broadcast %cst_39 : f32 to vector<4x256xf32>
    %119 = arith.select %117, %115, %118 : vector<4x256xi1>, vector<4x256xf32>
    %c239_i32_40 = arith.constant 239 : i32
    %120 = tpu.dynamic_rotate %83 by %c239_i32_40 dim 1 : vector<4x256xf32>, i32 -> vector<4x256xf32>
    %cst_41 = arith.constant 0.000000e+00 : f32
    %121 = vector.shape_cast %20 : vector<1x256xi1> to vector<1x256xi1>
    %122 = vector.broadcast %121 : vector<1x256xi1> to vector<4x256xi1>
    %123 = vector.broadcast %cst_41 : f32 to vector<4x256xf32>
    %124 = arith.select %122, %120, %123 : vector<4x256xi1>, vector<4x256xf32>
    %125 = tpu.concatenate %89, %94, %99, %104, %83, %109, %114, %119, %124 in 0 : vector<4x256xf32>, vector<4x256xf32>, vector<4x256xf32>, vector<4x256xf32>, vector<4x256xf32>, vector<4x256xf32>, vector<4x256xf32>, vector<4x256xf32>, vector<4x256xf32> -> vector<36x256xf32>
    %cst_42 = arith.constant dense<0.000000e+00> : vector<4x256xf32>
    %126 = tpu.matmul %84, %125, %cst_42 {dimension_numbers = #tpu.dot_dimension_numbers<[1], [0], [0], [1], [0, 0, 1, 1], [], []>} : vector<4x36xf32>, vector<36x256xf32>, vector<4x256xf32> -> vector<4x256xf32>
    %cst_43 = arith.constant dense<0.000000e+00> : vector<4xf32>
    %127 = vector.multi_reduction <add>, %126, %cst_43 [1] : vector<4x256xf32> to vector<4xf32>
    %128 = vector.shape_cast %127 : vector<4xf32> to vector<4x1xf32>
    %129 = arith.mulf %126, %126 : vector<4x256xf32>
    %cst_44 = arith.constant dense<0.000000e+00> : vector<4xf32>
    %130 = vector.multi_reduction <add>, %129, %cst_44 [1] : vector<4x256xf32> to vector<4xf32>
    %131 = vector.shape_cast %130 : vector<4xf32> to vector<4x1xf32>
    %cst_45 = arith.constant 3.906250e-03 : f32
    %132 = vector.broadcast %cst_45 : f32 to vector<4x1xf32>
    %133 = arith.mulf %128, %132 : vector<4x1xf32>
    %cst_46 = arith.constant 3.906250e-03 : f32
    %134 = vector.broadcast %cst_46 : f32 to vector<4x1xf32>
    %135 = arith.mulf %131, %134 : vector<4x1xf32>
    %136 = arith.mulf %133, %133 : vector<4x1xf32>
    %137 = arith.subf %135, %136 : vector<4x1xf32>
    %138 = vector.broadcast %133 : vector<4x1xf32> to vector<4x256xf32>
    %139 = arith.subf %126, %138 : vector<4x256xf32>
    %cst_47 = arith.constant 9.99999974E-6 : f32
    %140 = vector.broadcast %cst_47 : f32 to vector<4x1xf32>
    %141 = arith.addf %137, %140 : vector<4x1xf32>
    %142 = math.rsqrt %141 : vector<4x1xf32>
    %143 = vector.broadcast %142 : vector<4x1xf32> to vector<4x256xf32>
    %144 = arith.mulf %139, %143 : vector<4x256xf32>
    %145 = arith.addf %1, %144 : vector<4x256xf32>
    %c0_48 = arith.constant 0 : index
    %c0_49 = arith.constant 0 : index
    %c0_50 = arith.constant 0 : index
    %146 = vector.load %arg4[%c0_48, %c0_49, %c0_50] : memref<1x4x256xf32, #tpu.memory_space<vmem>>, vector<1x4x256xf32>
    %147 = vector.shape_cast %146 : vector<1x4x256xf32> to vector<4x256xf32>
    %148 = vector.shape_cast %145 : vector<4x256xf32> to vector<1x4x256xf32>
    tpu.vector_store %arg4[%c0_48, %c0_49, %c0_50], %148 {strides = array<i32>} : memref<1x4x256xf32, #tpu.memory_space<vmem>>, vector<1x4x256xf32>,
    return
  }
  func.func @transform_0(%arg0: i32) -> (i32, i32, i32) {
    %c0_i32 = arith.constant 0 : i32
    %c0_i32_0 = arith.constant 0 : i32
    %c0_i32_1 = arith.constant 0 : i32
    return %arg0, %c0_i32, %c0_i32_0 : i32, i32, i32
  }
  func.func @transform_1(%arg0: i32) -> (i32, i32) {
    %c0_i32 = arith.constant 0 : i32
    %c0_i32_0 = arith.constant 0 : i32
    %c0_i32_1 = arith.constant 0 : i32
    return %c0_i32, %c0_i32_0 : i32, i32
  }
  func.func @transform_2(%arg0: i32) -> (i32, i32) {
    %c0_i32 = arith.constant 0 : i32
    %c0_i32_0 = arith.constant 0 : i32
    %c0_i32_1 = arith.constant 0 : i32
    return %c0_i32, %c0_i32_0 : i32, i32
  }
  func.func @transform_3(%arg0: i32) -> (i32, i32, i32) {
    %c0_i32 = arith.constant 0 : i32
    %c0_i32_0 = arith.constant 0 : i32
    %c0_i32_1 = arith.constant 0 : i32
    return %arg0, %c0_i32, %c0_i32_0 : i32, i32, i32
  }
}

</mosaic_0001>

<llo_original>
// kernel: tpu_custom_call.1
$region0: #{tpu_custom_call.1}
  #allocation0 [shape = 'u32[]', space=smem, size = 0x4, offset = 0x4, fixed_abs, tag = 'smem constant byte address 0x4 - core index']
  #allocation1 [shape = 'u32[144,128]{1,0:T(1,128)}', space=vmem, size = 0x12000, scoped, tag = 'internal scratch']
  %s0 = inlined_call_operand.hbm [shape: f32[2,4,256], index: 0, kind: input, shape index: {}]
  %s1 = inlined_call_operand.hbm [shape: f32[4,36], index: 1, kind: input, shape index: {}]
  %s2 = inlined_call_operand.hbm [shape: f32[4,36], index: 2, kind: input, shape index: {}]
  %s3 = inlined_call_operand.hbm [shape: f32[2,4,256], index: 3, kind: output, shape index: {}]
  %s4 = sld [smem:[#allocation0]]
  $region57: #{tpu_custom_call.1} parent=0
    _
  %s6 = ssub.s32 1, %s4
  %s7 = scalar_select 0, %s6, %s4
  $region1: #{tpu_custom_call.1} parent=0
    #allocation2 [shape = 'u8[8192]{0}', space=vmem, size = 0x2000, scoped, tag = 'input window, operand 0']
    #allocation3 [shape = 's32[2]{0}', space=sflag, size = 0x8, scoped, tag = 'scoped memory for tpu_custom_call.1']
    #allocation4 [shape = 's32[2]{0}', space=sflag, size = 0x8, scoped, tag = 'scoped memory for tpu_custom_call.1']
    #allocation5 [shape = 'u8[2048]{0}', space=vmem, size = 0x800, scoped, tag = 'input window, operand 1, single buffered']
    #allocation6 [shape = 's32[1]{0}', space=sflag, size = 0x4, scoped, tag = 'scoped memory for tpu_custom_call.1']
    #allocation7 [shape = 'u8[2048]{0}', space=vmem, size = 0x800, scoped, tag = 'input window, operand 2, single buffered']
    #allocation8 [shape = 'u8[8192]{0}', space=vmem, size = 0x2000, scoped, tag = 'output window, operand 0']
    %8 = vsyncpa [#allocation3], 0
    %s9 = scalar_lea.sflag [#allocation3], 1
    %10 = vsyncpa %s9, 0
    %11 = vsyncpa [#allocation6], 0
    %12 = vsyncpa [#allocation4], 0
    %s13 = scalar_lea.sflag [#allocation4], 1
    %14 = vsyncpa %s13, 0
    loop: start=0, step=1, limit=4
    $region2: #{tpu_custom_call.1} parent=1 // loop_pre_header
      _
    $region3: #{tpu_custom_call.1} parent=1 // loop_header
      %s16 = sphi 0, %s20
      %p17 = scmp.ge.s32.totalorder %s16, 4
      %s26 = sphi 0, %s28
      %s29 = sphi 0, %s26
      %s30 = sphi 0, %s29
      %s46 = sphi 0, %s30
      %s50 = sphi 0, %s50
      %s52 = sphi 0, %s50
      %s53 = sphi 0, %s52
      %s67 = sphi 0, %s53
      %s71 = sphi 0, %s71
      %s73 = sphi 0, %s71
      %s74 = sphi 0, %s73
      %s88 = sphi 0, %s74
      %s94 = sphi 0, %s96
      %s97 = sphi 0, %s94
      %s98 = sphi 0, %s97
      %s114 = sphi 0, %s98
    $region4: #{tpu_custom_call.1} parent=1 // loop_header_branch
      %19 = sbr.rel (%p17) target = $region8
    $region5: #{tpu_custom_call.1} parent=1 // loop_body
      %s21 = ssub.s32 %s16, 1
      %s22 = ssub.s32 %s16, 2
      %s23 = sadd.s32 %s16, 1
      %s24 = ssub.s32 %s16, %s23
      %p25 = scmp.eq.s32.totalorder %s24, 0
      %s27 = sadd.s32 %s26, 1
      %s28 = scalar_select %p25, %s26, %s27
      %p31 = pneg %p25
      %p32 = scmp.eq.s32.totalorder %s16, 1
      %p33 = por %p31, %p32
      %p34 = scmp.ne.s32.totalorder %s26, %s29
      %p35 = scmp.eq.s32.totalorder %s16, 0
      %p36 = por %p34, %p35
      %p37 = scmp.ne.s32.totalorder %s26, %s29
      %p38 = scmp.eq.s32.totalorder %s21, 1
      %p39 = por %p37, %p38
      %p40 = scmp.ne.s32.totalorder %s29, %s30
      %p41 = scmp.eq.s32.totalorder %s21, 0
      %p42 = por %p40, %p41
      %p43 = scmp.ne.s32.totalorder %s29, %s30
      %p44 = scmp.eq.s32.totalorder %s22, 1
      %p45 = por %p43, %p44
      %p47 = scmp.ne.s32.totalorder %s30, %s46
      %p48 = scmp.eq.s32.totalorder %s22, 0
      %p49 = por %p47, %p48
      %s51 = sadd.s32 %s50, 1
      %p54 = scmp.eq.s32.totalorder %s16, 1
      %p55 = scmp.ne.s32.totalorder %s50, %s52
      %p56 = scmp.eq.s32.totalorder %s16, 0
      %p57 = por %p55, %p56
      %p58 = scmp.ne.s32.totalorder %s50, %s52
      %p59 = scmp.eq.s32.totalorder %s21, 1
      %p60 = por %p58, %p59
      %p61 = scmp.ne.s32.totalorder %s52, %s53
      %p62 = scmp.eq.s32.totalorder %s21, 0
      %p63 = por %p61, %p62
      %p64 = scmp.ne.s32.totalorder %s52, %s53
      %p65 = scmp.eq.s32.totalorder %s22, 1
      %p66 = por %p64, %p65
      %p68 = scmp.ne.s32.totalorder %s53, %s67
      %p69 = scmp.eq.s32.totalorder %s22, 0
      %p70 = por %p68, %p69
      %s72 = sadd.s32 %s71, 1
      %p75 = scmp.eq.s32.totalorder %s16, 1
      %p76 = scmp.ne.s32.totalorder %s71, %s73
      %p77 = scmp.eq.s32.totalorder %s16, 0
      %p78 = por %p76, %p77
      %p79 = scmp.ne.s32.totalorder %s71, %s73
      %p80 = scmp.eq.s32.totalorder %s21, 1
      %p81 = por %p79, %p80
      %p82 = scmp.ne.s32.totalorder %s73, %s74
      %p83 = scmp.eq.s32.totalorder %s21, 0
      %p84 = por %p82, %p83
      %p85 = scmp.ne.s32.totalorder %s73, %s74
      %p86 = scmp.eq.s32.totalorder %s22, 1
      %p87 = por %p85, %p86
      %p89 = scmp.ne.s32.totalorder %s74, %s88
      %p90 = scmp.eq.s32.totalorder %s22, 0
      %p91 = por %p89, %p90
      %s92 = ssub.s32 %s16, %s23
      %p93 = scmp.eq.s32.totalorder %s92, 0
      %s95 = sadd.s32 %s94, 1
      %s96 = scalar_select %p93, %s94, %s95
      %p99 = pneg %p93
      %p100 = scmp.eq.s32.totalorder %s16, 1
      %p101 = por %p99, %p100
      %p102 = scmp.ne.s32.totalorder %s94, %s97
      %p103 = scmp.eq.s32.totalorder %s16, 0
      %p104 = por %p102, %p103
      %p105 = scmp.ne.s32.totalorder %s94, %s97
      %p106 = scmp.eq.s32.totalorder %s21, 1
      %p107 = por %p105, %p106
      %p108 = scmp.ne.s32.totalorder %s97, %s98
      %p109 = scmp.eq.s32.totalorder %s21, 0
      %p110 = por %p108, %p109
      %p111 = scmp.ne.s32.totalorder %s97, %s98
      %p112 = scmp.eq.s32.totalorder %s22, 1
      %p113 = por %p111, %p112
      %p115 = scmp.ne.s32.totalorder %s98, %s114
      %p116 = scmp.eq.s32.totalorder %s22, 0
      %p117 = por %p115, %p116
      %p118 = scmp.le.s32.totalorder 1, %s16
      %p119 = scmp.lt.s32.totalorder %s16, 3
      %p120 = pnand %p118, %p119
      %p121 = pneg %p120
      // Predicated region
      $region9: #{tpu_custom_call.1} parent=5 // pred_check
        _
      $region10: #{tpu_custom_call.1} parent=5 // pred_check_branch
        %123 = sbr.rel (%p120) target = $region12
      $region11: #{tpu_custom_call.1} parent=5 // pred_region
        %s124 = ssub.s32 %s16, 1
        // Predicated region
        $region13: #{tpu_custom_call.1} parent=11 // pred_check
          %p125 = pneg %p63
        $region14: #{tpu_custom_call.1} parent=11 // pred_check_branch
          %127 = sbr.rel (%p125) target = $region16
        $region15: #{tpu_custom_call.1} parent=11 // pred_region
          %s129 = ssub.s32 64, 64
          %130 = vsyncadd [#allocation6], %s129
          %s132 = sshll.u32 [#allocation5], 4
          %s133 = int_to_ptr.vmem [resolvable:$true] %s132
          %135 = dma.hbm_to_vmem [thread:$0]  %s1, 64, %s133, [#allocation6]
        $region16: #{tpu_custom_call.1} parent=11 // pred_fallthru
          _
        // Predicated region
        $region17: #{tpu_custom_call.1} parent=11 // pred_check
          %p136 = pneg %p84
        $region18: #{tpu_custom_call.1} parent=11 // pred_check_branch
          %138 = sbr.rel (%p136) target = $region20
        $region19: #{tpu_custom_call.1} parent=11 // pred_region
          %s140 = ssub.s32 64, 64
          %141 = vsyncadd [#allocation6], %s140
          %s143 = sshll.u32 [#allocation7], 4
          %s144 = int_to_ptr.vmem [resolvable:$true] %s143
          %146 = dma.hbm_to_vmem [thread:$0]  %s2, 64, %s144, [#allocation6]
        $region20: #{tpu_custom_call.1} parent=11 // pred_fallthru
          _
      $region12: #{tpu_custom_call.1} parent=5 // pred_fallthru
        _
      %p147 = scmp.lt.s32.totalorder %s16, 2
      // Predicated region
      $region21: #{tpu_custom_call.1} parent=5 // pred_check
        %p148 = pneg %p147
      $region22: #{tpu_custom_call.1} parent=5 // pred_check_branch
        %150 = sbr.rel (%p148) target = $region24
      $region23: #{tpu_custom_call.1} parent=5 // pred_region
        // Predicated region
        $region25: #{tpu_custom_call.1} parent=23 // pred_check
          %p151 = pneg %p36
        $region26: #{tpu_custom_call.1} parent=23 // pred_check_branch
          %153 = sbr.rel (%p151) target = $region28
        $region27: #{tpu_custom_call.1} parent=23 // pred_region
          %s154 = sand.u32 %s26, 1
          %s155 = scalar_lea.sflag [#allocation3], %s154
          %s156 = sand.u32 %s26, 1
          %s157 = smul.addr %s156, 8
          %s158 = scalar_lea.vmem [#allocation2], %s157
          %s160 = ssub.s32 128, 128
          %161 = vsyncadd %s155, %s160
          %s162 = smul.addr %s16, 2
          %s163 = smul.addr %s162, 64
          %s164 = scalar_lea.hbm %s0, %s163
          %s166 = sshll.u32 %s158, 4
          %s167 = int_to_ptr.vmem [resolvable:$true] %s166
          %169 = dma.hbm_to_vmem [thread:$0]  %s164, 128, %s167, %s155
        $region28: #{tpu_custom_call.1} parent=23 // pred_fallthru
          _
      $region24: #{tpu_custom_call.1} parent=5 // pred_fallthru
        _
      %p170 = scmp.le.s32.totalorder 1, %s16
      %p171 = scmp.lt.s32.totalorder %s16, 3
      %p172 = pnand %p170, %p171
      %p173 = pneg %p172
      // Predicated region
      $region29: #{tpu_custom_call.1} parent=5 // pred_check
        _
      $region30: #{tpu_custom_call.1} parent=5 // pred_check_branch
        %175 = sbr.rel (%p172) target = $region32
      $region31: #{tpu_custom_call.1} parent=5 // pred_region
        %s176 = ssub.s32 %s16, 1
        %s177 = sand.u32 %s29, 1
        %s178 = scalar_lea.sflag [#allocation3], %s177
        %s179 = sand.u32 %s29, 1
        %s180 = smul.addr %s179, 8
        %s181 = scalar_lea.vmem [#allocation2], %s180
        // Predicated region
        $region33: #{tpu_custom_call.1} parent=31 // pred_check
          %p182 = pneg %p42
        $region34: #{tpu_custom_call.1} parent=31 // pred_check_branch
          %184 = sbr.rel (%p182) target = $region36
        $region35: #{tpu_custom_call.1} parent=31 // pred_region
          %185 = dma.done %s178, 128
        $region36: #{tpu_custom_call.1} parent=31 // pred_fallthru
          _
        // Predicated region
        $region37: #{tpu_custom_call.1} parent=31 // pred_check
          %p186 = pneg %p63
        $region38: #{tpu_custom_call.1} parent=31 // pred_check_branch
          %188 = sbr.rel (%p186) target = $region40
        $region39: #{tpu_custom_call.1} parent=31 // pred_region
          %189 = dma.done [#allocation6], 64
        $region40: #{tpu_custom_call.1} parent=31 // pred_fallthru
          _
        // Predicated region
        $region41: #{tpu_custom_call.1} parent=31 // pred_check
          %p190 = pneg %p84
        $region42: #{tpu_custom_call.1} parent=31 // pred_check_branch
          %192 = sbr.rel (%p190) target = $region44
        $region43: #{tpu_custom_call.1} parent=31 // pred_region
          %193 = dma.done [#allocation6], 64
        $region44: #{tpu_custom_call.1} parent=31 // pred_fallthru
          _
        %s194 = sand.u32 %s29, 1
        %s195 = scalar_lea.sflag [#allocation3], %s194
        %s196 = sand.u32 %s29, 1
        %s197 = smul.addr %s196, 8
        %s198 = scalar_lea.vmem [#allocation2], %s197
        %p199 = pneg %p42
        %p200 = pneg %p39
        %p201 = pneg %p63
        %p202 = pneg %p60
        %p203 = pneg %p84
        %p204 = pneg %p81
        %p205 = pneg %p110
        %p206 = pneg %p107
        %s207 = sand.u32 %s97, 1
        %s208 = scalar_lea.sflag [#allocation4], %s207
        %s209 = sand.u32 %s97, 1
        %s210 = smul.addr %s209, 8
        %s211 = scalar_lea.vmem [#allocation8], %s210
        %v212 = vld [vmem:[%s181] sm:$0xff]
        %v213 = vlaneseq
        %v214 = vand.u32 %v213, 127
        %v215 = vadd.s32 %v214, 128
        %v216 = vand.u32 %v214, 255
        %v217 = vand.u32 %v215, 255
        %v218 = vand.u32 %v216, 15
        %v219 = vand.u32 %v217, 15
        %v220 = vshra.s32 %v216, 4
        %v221 = vshra.s32 %v217, 4
        %vm222 = vcmp.ge.s32.totalorder %v220, 1
        %vm223 = vcmp.ge.s32.totalorder %v221, 1
        %vm224 = vcmp.lt.s32.totalorder %v220, 15
        %vm225 = vcmp.lt.s32.totalorder %v221, 15
        %vm226 = vcmp.ge.s32.totalorder %v218, 1
        %vm227 = vcmp.ge.s32.totalorder %v219, 1
        %vm228 = vcmp.lt.s32.totalorder %v218, 15
        %vm229 = vcmp.lt.s32.totalorder %v219, 15
        %vm230 = vmand %vm222, %vm226
        %vm231 = vmand %vm223, %vm227
        %vm232 = vmand %vm222, %vm228
        %vm233 = vmand %vm223, %vm229
        %vm234 = vmand %vm224, %vm226
        %vm235 = vmand %vm225, %vm227
        %vm236 = vmand %vm224, %vm228
        %vm237 = vmand %vm225, %vm229
        %v238 = vld [vmem:[#allocation5] sm:$0xf]
        %v240 = vcombine.high %v212, %v212
        %242 = vrot.lane.b32.xlu0 %v212, 17
        %v243 = vpop.permute.xlu0 %242
        %244 = vrot.lane.b32.xlu0 %v240, 17
        %v245 = vpop.permute.xlu0 %244
        %vm246 = vcmp.lt.s32.totalorder %v214, 17
        %v247 = vsel %vm246, %v243, %v245
        %v248 = vsel %vm246, %v245, %v243
        %v249 = vsel %vm230, 1, 0
        %v250 = vsel %vm231, 1, 0
        %vm251 = vcmp.eq.s32.totalorder %v249, 1
        %vm252 = vcmp.eq.s32.totalorder %v250, 1
        %v253 = vsel %vm251, %v248, 0.0
        %v254 = vsel %vm252, %v247, 0.0
        %255 = vrot.lane.b32.xlu0 %v212, 16
        %v256 = vpop.permute.xlu0 %255
        %257 = vrot.lane.b32.xlu0 %v240, 16
        %v258 = vpop.permute.xlu0 %257
        %vm259 = vcmp.lt.s32.totalorder %v214, 16
        %v260 = vsel %vm259, %v256, %v258
        %v261 = vsel %vm259, %v258, %v256
        %v262 = vsel %vm222, 1, 0
        %v263 = vsel %vm223, 1, 0
        %vm264 = vcmp.eq.s32.totalorder %v262, 1
        %vm265 = vcmp.eq.s32.totalorder %v263, 1
        %v266 = vsel %vm264, %v261, 0.0
        %v267 = vsel %vm265, %v260, 0.0
        %268 = vrot.lane.b32.xlu0 %v212, 15
        %v269 = vpop.permute.xlu0 %268
        %270 = vrot.lane.b32.xlu0 %v240, 15
        %v271 = vpop.permute.xlu0 %270
        %vm272 = vcmp.lt.s32.totalorder %v214, 15
        %v273 = vsel %vm272, %v269, %v271
        %v274 = vsel %vm272, %v271, %v269
        %v275 = vsel %vm232, 1, 0
        %v276 = vsel %vm233, 1, 0
        %vm277 = vcmp.eq.s32.totalorder %v275, 1
        %vm278 = vcmp.eq.s32.totalorder %v276, 1
        %v279 = vsel %vm277, %v274, 0.0
        %v280 = vsel %vm278, %v273, 0.0
        %281 = vrot.lane.b32.xlu0 %v212, 1
        %v282 = vpop.permute.xlu0 %281
        %283 = vrot.lane.b32.xlu0 %v240, 1
        %v284 = vpop.permute.xlu0 %283
        %vm285 = vcmp.lt.s32.totalorder %v214, 1
        %v286 = vsel %vm285, %v282, %v284
        %v287 = vsel %vm285, %v284, %v282
        %v288 = vsel %vm226, 1, 0
        %v289 = vsel %vm227, 1, 0
        %vm290 = vcmp.eq.s32.totalorder %v288, 1
        %vm291 = vcmp.eq.s32.totalorder %v289, 1
        %v292 = vsel %vm290, %v287, 0.0
        %v293 = vsel %vm291, %v286, 0.0
        %294 = vrot.lane.b32.xlu0 %v212, 127
        %v295 = vpop.permute.xlu0 %294
        %296 = vrot.lane.b32.xlu0 %v240, 127
        %v297 = vpop.permute.xlu0 %296
        %vm298 = vcmp.lt.s32.totalorder %v214, 127
        %v299 = vsel %vm298, %v295, %v297
        %v300 = vsel %vm298, %v297, %v295
        %v301 = vsel %vm228, 1, 0
        %v302 = vsel %vm229, 1, 0
        %vm303 = vcmp.eq.s32.totalorder %v301, 1
        %vm304 = vcmp.eq.s32.totalorder %v302, 1
        %v305 = vsel %vm303, %v299, 0.0
        %v306 = vsel %vm304, %v300, 0.0
        %307 = vrot.lane.b32.xlu0 %v212, 113
        %v308 = vpop.permute.xlu0 %307
        %309 = vrot.lane.b32.xlu0 %v240, 113
        %v310 = vpop.permute.xlu0 %309
        %vm311 = vcmp.lt.s32.totalorder %v214, 113
        %v312 = vsel %vm311, %v308, %v310
        %v313 = vsel %vm311, %v310, %v308
        %v314 = vsel %vm234, 1, 0
        %v315 = vsel %vm235, 1, 0
        %vm316 = vcmp.eq.s32.totalorder %v314, 1
        %vm317 = vcmp.eq.s32.totalorder %v315, 1
        %v318 = vsel %vm316, %v312, 0.0
        %v319 = vsel %vm317, %v313, 0.0
        %320 = vrot.lane.b32.xlu0 %v212, 112
        %v321 = vpop.permute.xlu0 %320
        %322 = vrot.lane.b32.xlu0 %v240, 112
        %v323 = vpop.permute.xlu0 %322
        %vm324 = vcmp.lt.s32.totalorder %v214, 112
        %v325 = vsel %vm324, %v321, %v323
        %v326 = vsel %vm324, %v323, %v321
        %v327 = vsel %vm224, 1, 0
        %v328 = vsel %vm225, 1, 0
        %vm329 = vcmp.eq.s32.totalorder %v327, 1
        %vm330 = vcmp.eq.s32.totalorder %v328, 1
        %v331 = vsel %vm329, %v325, 0.0
        %v332 = vsel %vm330, %v326, 0.0
        %333 = vrot.lane.b32.xlu0 %v212, 111
        %v334 = vpop.permute.xlu0 %333
        %335 = vrot.lane.b32.xlu0 %v240, 111
        %v336 = vpop.permute.xlu0 %335
        %vm337 = vcmp.lt.s32.totalorder %v214, 111
        %v338 = vsel %vm337, %v334, %v336
        %v339 = vsel %vm337, %v336, %v334
        %v340 = vsel %vm236, 1, 0
        %v341 = vsel %vm237, 1, 0
        %vm342 = vcmp.eq.s32.totalorder %v340, 1
        %vm343 = vcmp.eq.s32.totalorder %v341, 1
        %v344 = vsel %vm342, %v338, 0.0
        %v345 = vsel %vm343, %v339, 0.0
        %v348 = vrot.slane %v266, 4
        %v349 = vrot.slane %v267, 4
        %v354 = vrot.slane %v292, 4
        %v355 = vrot.slane %v293, 4
        %v360 = vrot.slane %v305, 4
        %v361 = vrot.slane %v306, 4
        %v366 = vrot.slane %v331, 4
        %v367 = vrot.slane %v332, 4
        %vm370 = vcmask 1043456
        %v371 = vsel %vm370, %v253, %v348
        %v372 = vsel %vm370, %v254, %v349
        %v373 = vsel %vm370, %v279, %v354
        %v374 = vsel %vm370, %v280, %v355
        %v375 = vsel %vm370, %v212, %v360
        %v376 = vsel %vm370, %v240, %v361
        %v377 = vsel %vm370, %v318, %v366
        %v378 = vsel %vm370, %v319, %v367
        %vm379 = vcmask 293888
        %v381 = vsel %vm379, %v238, 0
        %v384 = vsel %vm370, %v344, 0
        %v387 = vsel %vm370, %v345, 0
        %389 = vmatprep.subr.mxu0 0.0
        %390 = vmatpush1.msra.mxu0 0.0
        %391 = vmatprep.subr.mxu0 0.0
        %392 = vmatpush1.msra.mxu0 0.0
        %393 = vmatprep.subr.mxu0 0.0
        %394 = vmatpush1.msra.mxu0 0.0
        %395 = vmatprep.subr.mxu0 0.0
        %396 = vmatpush1.msra.mxu0 0.0
        %397 = vmatprep.subr.mxu0 0.0
        %398 = vmatpush1.msra.mxu0 0.0
        %399 = vmatprep.subr.mxu0 0.0
        %400 = vmatpush1.msra.mxu0 0.0
        %401 = vmatprep.subr.mxu0 0.0
        %402 = vmatpush1.msra.mxu0 0.0
        %403 = vmatprep.subr.mxu0 0.0
        %404 = vmatpush1.msra.mxu0 0.0
        %405 = vmatprep.subr.mxu0 0.0
        %406 = vmatpush1.msra.mxu0 0.0
        %407 = vmatprep.subr.mxu0 0.0
        %408 = vmatpush1.msra.mxu0 0.0
        %409 = vmatprep.subr.mxu0 0.0
        %410 = vmatpush1.msra.mxu0 0.0
        %411 = vmatprep.subr.mxu0 %v387
        %412 = vmatpush1.msra.mxu0 %v384
        %413 = vmatprep.subr.mxu0 %v378
        %414 = vmatpush1.msra.mxu0 %v377
        %415 = vmatprep.subr.mxu0 %v376
        %416 = vmatpush1.msra.mxu0 %v375
        %417 = vmatprep.subr.mxu0 %v374
        %418 = vmatpush1.msra.mxu0 %v373
        %419 = vmatprep.subr.mxu0 %v372
        %420 = vmatpush1.msra.mxu0 %v371
        %421 = vmatprep.subr.mxu0 0.0
        %422 = vmatpush2.msra.mxu0 0.0
        %423 = vmatprep.subr.mxu0 0.0
        %424 = vmatpush2.msra.mxu0 0.0
        %425 = vmatprep.subr.mxu0 0.0
        %426 = vmatpush2.msra.mxu0 0.0
        %427 = vmatprep.subr.mxu0 0.0
        %428 = vmatpush2.msra.mxu0 0.0
        %429 = vmatprep.subr.mxu0 0.0
        %430 = vmatpush2.msra.mxu0 0.0
        %431 = vmatprep.subr.mxu0 0.0
        %432 = vmatpush2.msra.mxu0 0.0
        %433 = vmatprep.subr.mxu0 0.0
        %434 = vmatpush2.msra.mxu0 0.0
        %435 = vmatprep.subr.mxu0 0.0
        %436 = vmatpush2.msra.mxu0 0.0
        %437 = vmatprep.subr.mxu0 0.0
        %438 = vmatpush2.msra.mxu0 0.0
        %439 = vmatprep.subr.mxu0 0.0
        %440 = vmatpush2.msra.mxu0 0.0
        %441 = vmatprep.subr.mxu0 0.0
        %442 = vmatpush2.msra.mxu0 0.0
        %443 = vmatprep.subr.mxu0 0.0
        %444 = vmatpush2.msra.mxu0 0.0
        %445 = vmatprep.subr.mxu0 0.0
        %446 = vmatpush2.msra.mxu0 0.0
        %447 = vmatprep.subr.mxu0 0.0
        %448 = vmatpush2.msra.mxu0 0.0
        %449 = vmatprep.subr.mxu0 0.0
        %450 = vmatpush2.msra.mxu0 0.0
        %451 = vmatprep.subr.mxu0 0.0
        %452 = vmatpush2.msra.mxu0 0.0
        %453 = vmatprep.mubr.f32.mxu0 0.0
        %454 = vmatmul.mubr.f32.gmra.mxu0 %v381
        %v455 = vpop.f32.mrf.mxu0
        %v456 = vadd.f32 0.0, %v455
        %v457 = vpop.f32.mrf.mxu0
        %v458 = vadd.f32 0.0, %v457
        %459 = vdwg.mxu0
        %v460 = vsel %vm370, %v456, 0.0
        %v461 = vsel %vm370, %v458, 0.0
        %v462 = vadd.f32 %v460, %v461
        %463 = vadd.xlane.f32.xlu0 %v462
        %v464 = vpop.xlane.xlu0 %463
        %v465 = vmul.f32 %v456, %v456
        %v466 = vmul.f32 %v458, %v458
        %v467 = vsel %vm370, %v465, 0.0
        %v468 = vsel %vm370, %v466, 0.0
        %v469 = vadd.f32 %v467, %v468
        %470 = vadd.xlane.f32.xlu0 %v469
        %v471 = vpop.xlane.xlu0 %470
        %v472 = vmul.f32 %v464, 0.00390625
        %v473 = vmul.f32 %v471, 0.00390625
        %v474 = vmul.f32 %v472, %v472
        %v475 = vsub.f32 %v473, %v474
        %v476 = vsub.f32 %v456, %v472
        %v477 = vsub.f32 %v458, %v472
        %v478 = vadd.f32 %v475, 1e-05
        %v479 = vrsqrt.pop %v478
        %v480 = vmul.f32 %v476, %v479
        %v481 = vmul.f32 %v477, %v479
        %v482 = vmax.f32 %v480, 0.0
        %v483 = vmax.f32 %v481, 0.0
        %v484 = vld [vmem:[#allocation7] sm:$0xf]
        %485 = vrot.lane.b32.xlu0 %v482, 17
        %v486 = vpop.permute.xlu0 %485
        %487 = vrot.lane.b32.xlu0 %v483, 17
        %v488 = vpop.permute.xlu0 %487
        %v489 = vsel %vm246, %v486, %v488
        %v490 = vsel %vm246, %v488, %v486
        %v491 = vsel %vm251, %v490, 0.0
        %v492 = vsel %vm252, %v489, 0.0
        %493 = vrot.lane.b32.xlu0 %v482, 16
        %v494 = vpop.permute.xlu0 %493
        %495 = vrot.lane.b32.xlu0 %v483, 16
        %v496 = vpop.permute.xlu0 %495
        %v497 = vsel %vm259, %v494, %v496
        %v498 = vsel %vm259, %v496, %v494
        %v499 = vsel %vm264, %v498, 0.0
        %v500 = vsel %vm265, %v497, 0.0
        %501 = vrot.lane.b32.xlu0 %v482, 15
        %v502 = vpop.permute.xlu0 %501
        %503 = vrot.lane.b32.xlu0 %v483, 15
        %v504 = vpop.permute.xlu0 %503
        %v505 = vsel %vm272, %v502, %v504
        %v506 = vsel %vm272, %v504, %v502
        %v507 = vsel %vm277, %v506, 0.0
        %v508 = vsel %vm278, %v505, 0.0
        %509 = vrot.lane.b32.xlu0 %v482, 1
        %v510 = vpop.permute.xlu0 %509
        %511 = vrot.lane.b32.xlu0 %v483, 1
        %v512 = vpop.permute.xlu0 %511
        %v513 = vsel %vm285, %v510, %v512
        %v514 = vsel %vm285, %v512, %v510
        %v515 = vsel %vm290, %v514, 0.0
        %v516 = vsel %vm291, %v513, 0.0
        %517 = vrot.lane.b32.xlu0 %v482, 127
        %v518 = vpop.permute.xlu0 %517
        %519 = vrot.lane.b32.xlu0 %v483, 127
        %v520 = vpop.permute.xlu0 %519
        %v521 = vsel %vm298, %v518, %v520
        %v522 = vsel %vm298, %v520, %v518
        %v523 = vsel %vm303, %v521, 0.0
        %v524 = vsel %vm304, %v522, 0.0
        %525 = vrot.lane.b32.xlu0 %v482, 113
        %v526 = vpop.permute.xlu0 %525
        %527 = vrot.lane.b32.xlu0 %v483, 113
        %v528 = vpop.permute.xlu0 %527
        %v529 = vsel %vm311, %v526, %v528
        %v530 = vsel %vm311, %v528, %v526
        %v531 = vsel %vm316, %v529, 0.0
        %v532 = vsel %vm317, %v530, 0.0
        %533 = vrot.lane.b32.xlu0 %v482, 112
        %v534 = vpop.permute.xlu0 %533
        %535 = vrot.lane.b32.xlu0 %v483, 112
        %v536 = vpop.permute.xlu0 %535
        %v537 = vsel %vm324, %v534, %v536
        %v538 = vsel %vm324, %v536, %v534
        %v539 = vsel %vm329, %v537, 0.0
        %v540 = vsel %vm330, %v538, 0.0
        %541 = vrot.lane.b32.xlu0 %v482, 111
        %v542 = vpop.permute.xlu0 %541
        %543 = vrot.lane.b32.xlu0 %v483, 111
        %v544 = vpop.permute.xlu0 %543
        %v545 = vsel %vm337, %v542, %v544
        %v546 = vsel %vm337, %v544, %v542
        %v547 = vsel %vm342, %v545, 0.0
        %v548 = vsel %vm343, %v546, 0.0
        %v551 = vrot.slane %v499, 4
        %v552 = vrot.slane %v500, 4
        %v557 = vrot.slane %v515, 4
        %v558 = vrot.slane %v516, 4
        %v563 = vrot.slane %v523, 4
        %v564 = vrot.slane %v524, 4
        %v569 = vrot.slane %v539, 4
        %v570 = vrot.slane %v540, 4
        %v573 = vsel %vm370, %v491, %v551
        %v574 = vsel %vm370, %v492, %v552
        %v575 = vsel %vm370, %v507, %v557
        %v576 = vsel %vm370, %v508, %v558
        %v577 = vsel %vm370, %v482, %v563
        %v578 = vsel %vm370, %v483, %v564
        %v579 = vsel %vm370, %v531, %v569
        %v580 = vsel %vm370, %v532, %v570
        %v582 = vsel %vm379, %v484, 0
        %v585 = vsel %vm370, %v547, 0
        %v588 = vsel %vm370, %v548, 0
        %590 = vmatprep.subr.mxu0 0.0
        %591 = vmatpush1.msra.mxu0 0.0
        %592 = vmatprep.subr.mxu0 0.0
        %593 = vmatpush1.msra.mxu0 0.0
        %594 = vmatprep.subr.mxu0 0.0
        %595 = vmatpush1.msra.mxu0 0.0
        %596 = vmatprep.subr.mxu0 0.0
        %597 = vmatpush1.msra.mxu0 0.0
        %598 = vmatprep.subr.mxu0 0.0
        %599 = vmatpush1.msra.mxu0 0.0
        %600 = vmatprep.subr.mxu0 0.0
        %601 = vmatpush1.msra.mxu0 0.0
        %602 = vmatprep.subr.mxu0 0.0
        %603 = vmatpush1.msra.mxu0 0.0
        %604 = vmatprep.subr.mxu0 0.0
        %605 = vmatpush1.msra.mxu0 0.0
        %606 = vmatprep.subr.mxu0 0.0
        %607 = vmatpush1.msra.mxu0 0.0
        %608 = vmatprep.subr.mxu0 0.0
        %609 = vmatpush1.msra.mxu0 0.0
        %610 = vmatprep.subr.mxu0 0.0
        %611 = vmatpush1.msra.mxu0 0.0
        %612 = vmatprep.subr.mxu0 %v588
        %613 = vmatpush1.msra.mxu0 %v585
        %614 = vmatprep.subr.mxu0 %v580
        %615 = vmatpush1.msra.mxu0 %v579
        %616 = vmatprep.subr.mxu0 %v578
        %617 = vmatpush1.msra.mxu0 %v577
        %618 = vmatprep.subr.mxu0 %v576
        %619 = vmatpush1.msra.mxu0 %v575
        %620 = vmatprep.subr.mxu0 %v574
        %621 = vmatpush1.msra.mxu0 %v573
        %622 = vmatprep.subr.mxu0 0.0
        %623 = vmatpush2.msra.mxu0 0.0
        %624 = vmatprep.subr.mxu0 0.0
        %625 = vmatpush2.msra.mxu0 0.0
        %626 = vmatprep.subr.mxu0 0.0
        %627 = vmatpush2.msra.mxu0 0.0
        %628 = vmatprep.subr.mxu0 0.0
        %629 = vmatpush2.msra.mxu0 0.0
        %630 = vmatprep.subr.mxu0 0.0
        %631 = vmatpush2.msra.mxu0 0.0
        %632 = vmatprep.subr.mxu0 0.0
        %633 = vmatpush2.msra.mxu0 0.0
        %634 = vmatprep.subr.mxu0 0.0
        %635 = vmatpush2.msra.mxu0 0.0
        %636 = vmatprep.subr.mxu0 0.0
        %637 = vmatpush2.msra.mxu0 0.0
        %638 = vmatprep.subr.mxu0 0.0
        %639 = vmatpush2.msra.mxu0 0.0
        %640 = vmatprep.subr.mxu0 0.0
        %641 = vmatpush2.msra.mxu0 0.0
        %642 = vmatprep.subr.mxu0 0.0
        %643 = vmatpush2.msra.mxu0 0.0
        %644 = vmatprep.subr.mxu0 0.0
        %645 = vmatpush2.msra.mxu0 0.0
        %646 = vmatprep.subr.mxu0 0.0
        %647 = vmatpush2.msra.mxu0 0.0
        %648 = vmatprep.subr.mxu0 0.0
        %649 = vmatpush2.msra.mxu0 0.0
        %650 = vmatprep.subr.mxu0 0.0
        %651 = vmatpush2.msra.mxu0 0.0
        %652 = vmatprep.subr.mxu0 0.0
        %653 = vmatpush2.msra.mxu0 0.0
        %654 = vmatprep.mubr.f32.mxu0 0.0
        %655 = vmatmul.mubr.f32.gmra.mxu0 %v582
        %v656 = vpop.f32.mrf.mxu0
        %v657 = vadd.f32 0.0, %v656
        %v658 = vpop.f32.mrf.mxu0
        %v659 = vadd.f32 0.0, %v658
        %660 = vdwg.mxu0
        %v661 = vsel %vm370, %v657, 0.0
        %v662 = vsel %vm370, %v659, 0.0
        %v663 = vadd.f32 %v661, %v662
        %664 = vadd.xlane.f32.xlu0 %v663
        %v665 = vpop.xlane.xlu0 %664
        %v666 = vmul.f32 %v657, %v657
        %v667 = vmul.f32 %v659, %v659
        %v668 = vsel %vm370, %v666, 0.0
        %v669 = vsel %vm370, %v667, 0.0
        %v670 = vadd.f32 %v668, %v669
        %671 = vadd.xlane.f32.xlu0 %v670
        %v672 = vpop.xlane.xlu0 %671
        %v673 = vmul.f32 %v665, 0.00390625
        %v674 = vmul.f32 %v672, 0.00390625
        %v675 = vmul.f32 %v673, %v673
        %v676 = vsub.f32 %v674, %v675
        %v677 = vsub.f32 %v657, %v673
        %v678 = vsub.f32 %v659, %v673
        %v679 = vadd.f32 %v676, 1e-05
        %v680 = vrsqrt.pop %v679
        %v681 = vmul.f32 %v677, %v680
        %v682 = vmul.f32 %v678, %v680
        %v685 = vcombine.low %v681, %v682
        %v687 = vadd.f32 %v212, %v685
        %688 = vst [vmem:[%s211] sm:$0xff] %v687
        %s689 = sand.u32 %s97, 1
        %s690 = scalar_lea.sflag [#allocation4], %s689
        %s691 = sand.u32 %s97, 1
        %s692 = smul.addr %s691, 8
        %s693 = scalar_lea.vmem [#allocation8], %s692
        // Predicated region
        $region45: #{tpu_custom_call.1} parent=31 // pred_check
          %p694 = pneg %p107
        $region46: #{tpu_custom_call.1} parent=31 // pred_check_branch
          %696 = sbr.rel (%p694) target = $region48
        $region47: #{tpu_custom_call.1} parent=31 // pred_region
          %s698 = ssub.s32 128, 128
          %699 = vsyncadd %s690, %s698
          %s700 = smul.addr %s21, 2
          %s701 = smul.addr %s700, 64
          %s702 = scalar_lea.hbm %s3, %s701
          %s704 = sshll.u32 %s693, 4
          %s705 = int_to_ptr.vmem [resolvable:$true] %s704
          %707 = dma.vmem_to_hbm [thread:$0]  %s705, 128, %s702, %s690
        $region48: #{tpu_custom_call.1} parent=31 // pred_fallthru
          _
      $region32: #{tpu_custom_call.1} parent=5 // pred_fallthru
        _
      %p708 = scmp.le.s32.totalorder 2, %s16
      // Predicated region
      $region49: #{tpu_custom_call.1} parent=5 // pred_check
        %p709 = pneg %p708
      $region50: #{tpu_custom_call.1} parent=5 // pred_check_branch
        %711 = sbr.rel (%p709) target = $region52
      $region51: #{tpu_custom_call.1} parent=5 // pred_region
        %s712 = ssub.s32 %s16, 2
        // Predicated region
        $region53: #{tpu_custom_call.1} parent=51 // pred_check
          %p713 = pneg %p113
        $region54: #{tpu_custom_call.1} parent=51 // pred_check_branch
          %715 = sbr.rel (%p713) target = $region56
        $region55: #{tpu_custom_call.1} parent=51 // pred_region
          %s716 = sand.u32 %s98, 1
          %s717 = scalar_lea.sflag [#allocation4], %s716
          %s718 = sand.u32 %s98, 1
          %s719 = smul.addr %s718, 8
          %s720 = scalar_lea.vmem [#allocation8], %s719
          %721 = dma.done %s717, 128
        $region56: #{tpu_custom_call.1} parent=51 // pred_fallthru
          _
      $region52: #{tpu_custom_call.1} parent=5 // pred_fallthru
        _
    $region6: #{tpu_custom_call.1} parent=1 // loop_footer
      %s20 = sadd.s32 1, %s16
    $region7: #{tpu_custom_call.1} parent=1 // loop_footer_branch
      %15 = sbr.rel target = $region3
    $region8: #{tpu_custom_call.1} parent=1 // loop_exit
      _
    %722 = vsyncpa [#allocation3], 1
    %s723 = scalar_lea.sflag [#allocation3], 1
    %724 = vsyncpa %s723, 1
    %725 = vsyncpa [#allocation6], 1
    %726 = vsyncpa [#allocation4], 1
    %s727 = scalar_lea.sflag [#allocation4], 1
    %728 = vsyncpa %s727, 1

</llo_original>
